<compile_context>
chip_gen: v5e
topology: v5e:2x2
jax: 0.10.0
libtpu: 0.0.40
codegen_flags: <defaults>
</compile_context>

<pallas_src>
import jax
import jax.numpy as jnp
from jax import lax
from jax.experimental import pallas as pl
from jax.experimental.pallas import tpu as pltpu


def _round_up(x: int, m: int) -> int:
    return (x + m - 1) // m * m


def _mixer_kernel(x_ref, w1_ref, w2_ref, w3_ref, wf_ref, b_ref, out_ref):
    """One row-tile of the fused WQMIX Q_star mixer.

    x_ref  : (TR, S+A)  bf16  [states | agent_qs]
    w1_ref : (S+A, 2E)  bf16  fused layer-1 weight (adv | V heads)
    w2_ref : (2E, 2E)   bf16  block-diag [w2, 0; 0, I]
    w3_ref : (2E, 2E)   bf16  block-diag [w3, 0; 0, I]
    wf_ref : (8, 2E)    bf16  final projection in row 0, rows 1..7 zero
    b_ref  : (8, 2E)    f32   rows 0..2 = layer biases, [3,0] = final bias
    out_ref: (1, 8, TR) f32   q_tot for these rows in row 0 (lane-dense)
    """
    x = x_ref[...]
    b1 = b_ref[0:1, :]
    b2 = b_ref[1:2, :]
    b3 = b_ref[2:3, :]
    bf = b_ref[3:4, 0:1]

    # fused layer 1: [h_adv | h_v] = relu(x @ W1 + b1)            (TR, 2E)
    h = jnp.dot(x, w1_ref[...], preferred_element_type=jnp.float32)
    h = jnp.maximum(h + b1, 0.0)

    # fused layers 2/3: block-diagonal weights, V half passes through identity
    # (valid because relu(relu(x)) == relu(x) and the V biases are zero here).
    h = jnp.dot(h.astype(jnp.bfloat16), w2_ref[...],
                preferred_element_type=jnp.float32)
    h = jnp.maximum(h + b2, 0.0)
    h = jnp.dot(h.astype(jnp.bfloat16), w3_ref[...],
                preferred_element_type=jnp.float32)
    h = jnp.maximum(h + b3, 0.0)

    # final projection: WF (8,2E) contracted against h (TR,2E) on their last
    # dims (same rhs-transposed pattern as flash-attention q @ k^T -> native
    # MXU, no XLU transpose of the big activation). Result is lane-dense.
    qrows = lax.dot_general(
        wf_ref[...], h.astype(jnp.bfloat16),
        dimension_numbers=(((1,), (1,)), ((), ())),
        preferred_element_type=jnp.float32)                      # (8, TR)
    out_ref[...] = (qrows + bf).reshape(out_ref.shape)


def mixer_star_forward(agent_qs, states, packed_params, *, tile_rows=None):
    """Pallas implementation of MixerStar.forward.

    agent_qs: (..., A) float32
    states  : (..., S) float32
    returns : (...,)   float32 q_tot
    """
    bs = agent_qs.shape[:-1]
    A = agent_qs.shape[-1]
    S = states.shape[-1]

    (W1, W2, W3, WF, BALL) = packed_params
    E2 = W2.shape[0]  # 2 * embed_dim

    # single merged input stream [states | agent_qs]; the concat fuses with
    # the bf16 cast the wrapper performs anyway.
    x = jnp.concatenate(
        [states.reshape(-1, S), agent_qs.reshape(-1, A)], axis=1
    ).astype(jnp.bfloat16)
    R = x.shape[0]

    if tile_rows is None:
        r128 = _round_up(max(R, 1), 128)
        if r128 <= 2048:
            tile_rows = r128                       # one grid step
        elif r128 <= 4096:
            tile_rows = _round_up((R + 1) // 2, 128)  # exactly 2 parallel tiles
        else:
            tile_rows = 2048                       # big tiles, >=3 steps
    R_pad = _round_up(R, tile_rows)
    if R_pad != R:
        x = jnp.pad(x, ((0, R_pad - R), (0, 0)))
    num_tiles = R_pad // tile_rows

    full = lambda shape: pl.BlockSpec(shape, lambda i, _s=shape: (0,) * len(_s))

    flops = 2 * R_pad * ((S + A) * E2 + 2 * E2 * E2 + 8 * E2)
    weight_bytes = sum(int(p.size) * p.dtype.itemsize for p in packed_params)
    bytes_accessed = R_pad * (S + A) * 2 + R_pad * 8 * 4 + weight_bytes

    out = pl.pallas_call(
        _mixer_kernel,
        out_shape=jax.ShapeDtypeStruct((num_tiles, 8, tile_rows), jnp.float32),
        grid_spec=pltpu.PrefetchScalarGridSpec(
            num_scalar_prefetch=0,
            grid=(num_tiles,),
            in_specs=[
                pl.BlockSpec((tile_rows, S + A), lambda i: (i, 0)),  # x tile
                full(W1.shape), full(W2.shape), full(W3.shape),
                full(WF.shape), full(BALL.shape),
            ],
            out_specs=pl.BlockSpec((1, 8, tile_rows), lambda i: (i, 0, 0)),
        ),
        compiler_params=pltpu.CompilerParams(
            dimension_semantics=("parallel",),
            # default scoped VMEM is plenty at <=2048-row tiles; only raise it
            # when a caller explicitly asks for very large tiles (v5e default
            # scoped limit is ~16 MiB).
            vmem_limit_bytes=(32 << 20) if tile_rows > 2048 else None,
        ),
        cost_estimate=pl.CostEstimate(
            flops=int(flops), transcendentals=0,
            bytes_accessed=int(bytes_accessed)),
    )(x, W1, W2, W3, WF, BALL)

    # row 0 of each (8, tile_rows) block holds q_tot for that tile.
    return out[:, 0, :].reshape(-1)[:R].reshape(bs)


def init_mixer_star_params(key, agent_num, state_dim, embed_dim):
    """Unpacked f32 params matching torch.nn.Linear default init, stored (in, out)."""
    input_dim = agent_num + state_dim

    def linear(key, fan_in, fan_out):
        kw, kb = jax.random.split(key)
        bound = 1.0 / jnp.sqrt(float(fan_in))
        w = jax.random.uniform(kw, (fan_in, fan_out), jnp.float32, -bound, bound)
        b = jax.random.uniform(kb, (1, fan_out), jnp.float32, -bound, bound)
        return w, b

    keys = jax.random.split(key, 6)
    w1, b1 = linear(keys[0], input_dim, embed_dim)
    w2, b2 = linear(keys[1], embed_dim, embed_dim)
    w3, b3 = linear(keys[2], embed_dim, embed_dim)
    w4, b4 = linear(keys[3], embed_dim, 1)
    wv1, bv1 = linear(keys[4], state_dim, embed_dim)
    wv2, bv2 = linear(keys[5], embed_dim, 1)
    return (w1, b1, w2, b2, w3, b3, w4, b4, wv1, bv1, wv2, bv2)


def pack_mixer_star_params(params, state_dim, agent_num, *,
                           weight_dtype=jnp.bfloat16):
    """Fuse the advantage head and the V head into MXU-friendly packed weights.

    Fused hidden-state layout: columns [0, E) = advantage head, columns
    [E, 2E) = V head (passed through layers 2/3 via identity blocks; valid
    because the V hidden is already non-negative after its relu and the V
    halves of the layer-2/3 biases are exactly zero).
    """
    (w1, b1, w2, b2, w3, b3, w4, b4, wv1, bv1, wv2, bv2) = params
    S, A = state_dim, agent_num
    E = w2.shape[0]

    # layer 1: single (S+A, 2E) weight acting on [states | agent_qs]
    w1_v = jnp.concatenate([wv1, jnp.zeros((A, E), jnp.float32)], axis=0)  # (S+A, E)
    W1 = jnp.concatenate([w1, w1_v], axis=1).astype(weight_dtype)          # (S+A, 2E)

    eye = jnp.eye(E, dtype=jnp.float32)
    zer = jnp.zeros((E, E), jnp.float32)
    W2 = jnp.block([[w2, zer], [zer, eye]]).astype(weight_dtype)           # (2E, 2E)
    W3 = jnp.block([[w3, zer], [zer, eye]]).astype(weight_dtype)           # (2E, 2E)

    wf_row = jnp.concatenate([w4, wv2], axis=0).reshape(1, 2 * E)          # (1, 2E)
    WF = jnp.concatenate([wf_row, jnp.zeros((7, 2 * E), jnp.float32)],
                         axis=0).astype(weight_dtype)                      # (8, 2E)

    # all biases packed into one (8, 2E) f32 array:
    #   row 0 = [b1 | bv1], row 1 = [b2 | 0], row 2 = [b3 | 0],
    #   element [3, 0] = b4 + bv2, rest zero.
    B1 = jnp.concatenate([b1, bv1], axis=1)
    B2 = jnp.concatenate([b2, jnp.zeros_like(b2)], axis=1)
    B3 = jnp.concatenate([b3, jnp.zeros_like(b3)], axis=1)
    bf_row = jnp.concatenate([b4 + bv2, jnp.zeros((1, 2 * E - 1), jnp.float32)],
                             axis=1)
    BALL = jnp.concatenate(
        [B1, B2, B3, bf_row, jnp.zeros((4, 2 * E), jnp.float32)],
        axis=0).astype(jnp.float32)                                        # (8, 2E)
    return (W1, W2, W3, WF, BALL)


def _reference_forward(agent_qs, states, params):
    """Pure-JAX f32 reference (unfused, matches the torch module exactly)."""
    (w1, b1, w2, b2, w3, b3, w4, b4, wv1, bv1, wv2, bv2) = params
    bs = agent_qs.shape[:-1]
    S = states.shape[-1]
    A = agent_qs.shape[-1]
    st = states.reshape(-1, S)
    qs = agent_qs.reshape(-1, A)
    x = jnp.concatenate([st, qs], axis=1)
    h = jax.nn.relu(x @ w1 + b1)
    h = jax.nn.relu(h @ w2 + b2)
    h = jax.nn.relu(h @ w3 + b3)
    adv = h @ w4 + b4
    hv = jax.nn.relu(st @ wv1 + bv1)
    v = hv @ wv2 + bv2
    return (adv + v).reshape(bs)


if __name__ == "__main__":
    # small shapes consistent with the module:
    # T=8 timesteps, B=16 batch, agent_num=4, state_dim=28, mixing_embed_dim=64
    # NOTE: at this size (R = 128 rows) the call is launch-overhead dominated;
    # batch more timesteps/minibatches into a single call when possible.
    T, B = 8, 16
    agent_num, state_dim, embed_dim = 4, 28, 64

    key = jax.random.PRNGKey(0)
    k_params, k_qs, k_st = jax.random.split(key, 3)

    params = init_mixer_star_params(k_params, agent_num, state_dim, embed_dim)
    packed = pack_mixer_star_params(params, state_dim, agent_num)

    agent_qs = jax.random.normal(k_qs, (T, B, agent_num), jnp.float32)
    states = jax.random.normal(k_st, (T, B, state_dim), jnp.float32)

    q_tot = mixer_star_forward(agent_qs, states, packed)
    q_tot = jax.block_until_ready(q_tot)

    ref = _reference_forward(agent_qs, states, params)
    assert q_tot.shape == (T, B), q_tot.shape
    max_err = float(jnp.max(jnp.abs(q_tot - ref)))
    # bf16 matmul operands (f32 accumulation) -> looser tolerance than pure f32
    assert jnp.allclose(q_tot, ref, atol=5e-2, rtol=5e-2), max_err

    print("KERNEL_OK")
</pallas_src>

<mosaic_0001>
module attributes {stable_mosaic.version = 11 : i64} {
  func.func @_mixer_kernel(%arg0: i32, %arg1: memref<128x32xbf16, #tpu.memory_space<vmem>>, %arg2: memref<32x128xbf16, #tpu.memory_space<vmem>>, %arg3: memref<128x128xbf16, #tpu.memory_space<vmem>>, %arg4: memref<128x128xbf16, #tpu.memory_space<vmem>>, %arg5: memref<8x128xbf16, #tpu.memory_space<vmem>>, %arg6: memref<8x128xf32, #tpu.memory_space<vmem>>, %arg7: memref<1x8x128xf32, #tpu.memory_space<vmem>>) attributes {dimension_semantics = [#tpu.dimension_semantics<parallel>], iteration_bounds = array<i64: 1>, scalar_prefetch = 0 : i64, scratch_operands = 0 : i64, tpu.core_type = #tpu.core_type<tc>, window_params = [{transform_indices = @transform_0, window_bounds = array<i64: 128, 32>}, {pipeline_mode = #tpu.pipeline_mode<synchronous>, transform_indices = @transform_1, window_bounds = array<i64: 32, 128>}, {pipeline_mode = #tpu.pipeline_mode<synchronous>, transform_indices = @transform_2, window_bounds = array<i64: 128, 128>}, {pipeline_mode = #tpu.pipeline_mode<synchronous>, transform_indices = @transform_3, window_bounds = array<i64: 128, 128>}, {pipeline_mode = #tpu.pipeline_mode<synchronous>, transform_indices = @transform_4, window_bounds = array<i64: 8, 128>}, {pipeline_mode = #tpu.pipeline_mode<synchronous>, transform_indices = @transform_5, window_bounds = array<i64: 8, 128>}, {transform_indices = @transform_6, window_bounds = array<i64: 1, 8, 128>}]} {
    %c0 = arith.constant 0 : index
    %c0_0 = arith.constant 0 : index
    %0 = vector.load %arg1[%c0, %c0_0] : memref<128x32xbf16, #tpu.memory_space<vmem>>, vector<128x32xbf16>
    %c0_1 = arith.constant 0 : index
    %c0_2 = arith.constant 0 : index
    %1 = vector.load %arg6[%c0_1, %c0_2] : memref<8x128xf32, #tpu.memory_space<vmem>>, vector<1x128xf32>
    %c1 = arith.constant 1 : index
    %c0_3 = arith.constant 0 : index
    %2 = vector.load %arg6[%c1, %c0_3] : memref<8x128xf32, #tpu.memory_space<vmem>>, vector<1x128xf32>
    %c2 = arith.constant 2 : index
    %c0_4 = arith.constant 0 : index
    %3 = vector.load %arg6[%c2, %c0_4] : memref<8x128xf32, #tpu.memory_space<vmem>>, vector<1x128xf32>
    %c3 = arith.constant 3 : index
    %c0_5 = arith.constant 0 : index
    %4 = vector.load %arg6[%c3, %c0_5] : memref<8x128xf32, #tpu.memory_space<vmem>>, vector<1x1xf32>
    %c0_6 = arith.constant 0 : index
    %c0_7 = arith.constant 0 : index
    %5 = vector.load %arg2[%c0_6, %c0_7] : memref<32x128xbf16, #tpu.memory_space<vmem>>, vector<32x128xbf16>
    %cst = arith.constant dense<0.000000e+00> : vector<128x128xf32>
    %6 = tpu.matmul %0, %5, %cst {dimension_numbers = #tpu.dot_dimension_numbers<[1], [0], [0], [1], [0, 0, 1, 1], [], []>} : vector<128x32xbf16>, vector<32x128xbf16>, vector<128x128xf32> -> vector<128x128xf32>
    %7 = vector.broadcast %1 : vector<1x128xf32> to vector<128x128xf32>
    %8 = arith.addf %6, %7 : vector<128x128xf32>
    %cst_8 = arith.constant 0.000000e+00 : f32
    %9 = vector.broadcast %cst_8 : f32 to vector<128x128xf32>
    %10 = arith.maximumf %8, %9 : vector<128x128xf32>
    %11 = arith.truncf %10 : vector<128x128xf32> to vector<128x128xbf16>
    %c0_9 = arith.constant 0 : index
    %c0_10 = arith.constant 0 : index
    %12 = vector.load %arg3[%c0_9, %c0_10] : memref<128x128xbf16, #tpu.memory_space<vmem>>, vector<128x128xbf16>
    %cst_11 = arith.constant dense<0.000000e+00> : vector<128x128xf32>
    %13 = tpu.matmul %11, %12, %cst_11 {dimension_numbers = #tpu.dot_dimension_numbers<[1], [0], [0], [1], [0, 0, 1, 1], [], []>} : vector<128x128xbf16>, vector<128x128xbf16>, vector<128x128xf32> -> vector<128x128xf32>
    %14 = vector.broadcast %2 : vector<1x128xf32> to vector<128x128xf32>
    %15 = arith.addf %13, %14 : vector<128x128xf32>
    %cst_12 = arith.constant 0.000000e+00 : f32
    %16 = vector.broadcast %cst_12 : f32 to vector<128x128xf32>
    %17 = arith.maximumf %15, %16 : vector<128x128xf32>
    %18 = arith.truncf %17 : vector<128x128xf32> to vector<128x128xbf16>
    %c0_13 = arith.constant 0 : index
    %c0_14 = arith.constant 0 : index
    %19 = vector.load %arg4[%c0_13, %c0_14] : memref<128x128xbf16, #tpu.memory_space<vmem>>, vector<128x128xbf16>
    %cst_15 = arith.constant dense<0.000000e+00> : vector<128x128xf32>
    %20 = tpu.matmul %18, %19, %cst_15 {dimension_numbers = #tpu.dot_dimension_numbers<[1], [0], [0], [1], [0, 0, 1, 1], [], []>} : vector<128x128xbf16>, vector<128x128xbf16>, vector<128x128xf32> -> vector<128x128xf32>
    %21 = vector.broadcast %3 : vector<1x128xf32> to vector<128x128xf32>
    %22 = arith.addf %20, %21 : vector<128x128xf32>
    %cst_16 = arith.constant 0.000000e+00 : f32
    %23 = vector.broadcast %cst_16 : f32 to vector<128x128xf32>
    %24 = arith.maximumf %22, %23 : vector<128x128xf32>
    %c0_17 = arith.constant 0 : index
    %c0_18 = arith.constant 0 : index
    %25 = vector.load %arg5[%c0_17, %c0_18] : memref<8x128xbf16, #tpu.memory_space<vmem>>, vector<8x128xbf16>
    %26 = arith.truncf %24 : vector<128x128xf32> to vector<128x128xbf16>
    %cst_19 = arith.constant dense<0.000000e+00> : vector<8x128xf32>
    %27 = tpu.matmul %25, %26, %cst_19 {dimension_numbers = #tpu.dot_dimension_numbers<[1], [1], [0], [0], [0, 0, 1, 0], [], []>} : vector<8x128xbf16>, vector<128x128xbf16>, vector<8x128xf32> -> vector<8x128xf32>
    %28 = vector.broadcast %4 : vector<1x1xf32> to vector<8x128xf32>
    %29 = arith.addf %27, %28 : vector<8x128xf32>
    %30 = vector.shape_cast %29 : vector<8x128xf32> to vector<1x8x128xf32>
    %c0_20 = arith.constant 0 : index
    %c0_21 = arith.constant 0 : index
    %c0_22 = arith.constant 0 : index
    %31 = vector.load %arg7[%c0_20, %c0_21, %c0_22] : memref<1x8x128xf32, #tpu.memory_space<vmem>>, vector<1x8x128xf32>
    tpu.vector_store %arg7[%c0_20, %c0_21, %c0_22], %30 {strides = array<i32>} : memref<1x8x128xf32, #tpu.memory_space<vmem>>, vector<1x8x128xf32>,
    return
  }
  func.func @transform_0(%arg0: i32) -> (i32, i32) {
    %c0_i32 = arith.constant 0 : i32
    %c0_i32_0 = arith.constant 0 : i32
    return %arg0, %c0_i32 : i32, i32
  }
  func.func @transform_1(%arg0: i32) -> (i32, i32) {
    %c0_i32 = arith.constant 0 : i32
    %c0_i32_0 = arith.constant 0 : i32
    %c0_i32_1 = arith.constant 0 : i32
    return %c0_i32, %c0_i32_0 : i32, i32
  }
  func.func @transform_2(%arg0: i32) -> (i32, i32) {
    %c0_i32 = arith.constant 0 : i32
    %c0_i32_0 = arith.constant 0 : i32
    %c0_i32_1 = arith.constant 0 : i32
    return %c0_i32, %c0_i32_0 : i32, i32
  }
  func.func @transform_3(%arg0: i32) -> (i32, i32) {
    %c0_i32 = arith.constant 0 : i32
    %c0_i32_0 = arith.constant 0 : i32
    %c0_i32_1 = arith.constant 0 : i32
    return %c0_i32, %c0_i32_0 : i32, i32
  }
  func.func @transform_4(%arg0: i32) -> (i32, i32) {
    %c0_i32 = arith.constant 0 : i32
    %c0_i32_0 = arith.constant 0 : i32
    %c0_i32_1 = arith.constant 0 : i32
    return %c0_i32, %c0_i32_0 : i32, i32
  }
  func.func @transform_5(%arg0: i32) -> (i32, i32) {
    %c0_i32 = arith.constant 0 : i32
    %c0_i32_0 = arith.constant 0 : i32
    %c0_i32_1 = arith.constant 0 : i32
    return %c0_i32, %c0_i32_0 : i32, i32
  }
  func.func @transform_6(%arg0: i32) -> (i32, i32, i32) {
    %c0_i32 = arith.constant 0 : i32
    %c0_i32_0 = arith.constant 0 : i32
    %c0_i32_1 = arith.constant 0 : i32
    return %arg0, %c0_i32, %c0_i32_0 : i32, i32, i32
  }
}

</mosaic_0001>

<llo_original>
// kernel: tpu_custom_call.1
$region0: #{tpu_custom_call.1}
  #allocation0 [shape = 'u32[]', space=smem, size = 0x4, offset = 0x4, fixed_abs, tag = 'smem constant byte address 0x4 - core index']
  #allocation1 [shape = 'u32[72,128]{1,0:T(1,128)}', space=vmem, size = 0x9000, scoped, tag = 'internal scratch']
  %s0 = inlined_call_operand.vmem [shape: bf16[128,32], index: 0, kind: input, shape index: {}]
  %s1 = inlined_call_operand.vmem [shape: bf16[32,128], index: 1, kind: input, shape index: {}]
  %s2 = inlined_call_operand.vmem [shape: bf16[128,128], index: 2, kind: input, shape index: {}]
  %s3 = inlined_call_operand.hbm [shape: bf16[128,128], index: 3, kind: input, shape index: {}]
  %s4 = inlined_call_operand.hbm [shape: bf16[8,128], index: 4, kind: input, shape index: {}]
  %s5 = inlined_call_operand.hbm [shape: f32[8,128], index: 5, kind: input, shape index: {}]
  %s6 = inlined_call_operand.hbm [shape: f32[1,8,128], index: 6, kind: output, shape index: {}]
  %s7 = sld [smem:[#allocation0]]
  $region46: #{tpu_custom_call.1} parent=0
    _
  %s9 = ssub.s32 1, %s7
  %s10 = scalar_select 0, %s9, %s7
  $region1: #{tpu_custom_call.1} parent=0
    #allocation2 [shape = 'u8[32768]{0}', space=vmem, size = 0x8000, scoped, tag = 'input window, operand 3, single buffered']
    #allocation3 [shape = 's32[1]{0}', space=sflag, size = 0x4, scoped, tag = 'scoped memory for tpu_custom_call.1']
    #allocation4 [shape = 's32[1]{0}', space=sflag, size = 0x4, scoped, tag = 'scoped memory for tpu_custom_call.1']
    #allocation5 [shape = 'u8[2048]{0}', space=vmem, size = 0x800, scoped, tag = 'input window, operand 4, single buffered']
    #allocation6 [shape = 's32[1]{0}', space=sflag, size = 0x4, scoped, tag = 'scoped memory for tpu_custom_call.1']
    #allocation7 [shape = 'u8[4096]{0}', space=vmem, size = 0x1000, scoped, tag = 'input window, operand 5, single buffered']
    #allocation8 [shape = 'u8[4096]{0}', space=vmem, size = 0x1000, scoped, tag = 'output window, operand 0, single buffered']
    %11 = vsyncpa [#allocation3], 0
    %12 = vsyncpa [#allocation6], 0
    %13 = vsyncpa [#allocation4], 0
    // Predicated region
    $region2: #{tpu_custom_call.1} parent=1 // pred_check
      _
    $region3: #{tpu_custom_call.1} parent=1 // pred_check_branch
      %15 = sbr.rel (0) target = $region5
    $region4: #{tpu_custom_call.1} parent=1 // pred_region
      _
    $region5: #{tpu_custom_call.1} parent=1 // pred_fallthru
      _
    // Predicated region
    $region6: #{tpu_custom_call.1} parent=1 // pred_check
      _
    $region7: #{tpu_custom_call.1} parent=1 // pred_check_branch
      %17 = sbr.rel (0) target = $region9
    $region8: #{tpu_custom_call.1} parent=1 // pred_region
      _
    $region9: #{tpu_custom_call.1} parent=1 // pred_fallthru
      _
    // Predicated region
    $region10: #{tpu_custom_call.1} parent=1 // pred_check
      _
    $region11: #{tpu_custom_call.1} parent=1 // pred_check_branch
      %19 = sbr.rel (0) target = $region13
    $region12: #{tpu_custom_call.1} parent=1 // pred_region
      _
    $region13: #{tpu_custom_call.1} parent=1 // pred_fallthru
      _
    // Predicated region
    $region14: #{tpu_custom_call.1} parent=1 // pred_check
      _
    $region15: #{tpu_custom_call.1} parent=1 // pred_check_branch
      %21 = sbr.rel (0) target = $region17
    $region16: #{tpu_custom_call.1} parent=1 // pred_region
      %23 = vsyncadd [#allocation3], 0
      %s24 = sshll.u32 %s3, 4
      %s25 = int_to_ptr.hbm [resolvable:$true] %s24
      %s26 = sshll.u32 [#allocation2], 4
      %s27 = int_to_ptr.vmem [resolvable:$true] %s26
      %32 = dma.hbm_to_vmem [thread:$0]  %s25, 1024, %s27, [#allocation3], 64, 64, 4
    $region17: #{tpu_custom_call.1} parent=1 // pred_fallthru
      _
    // Predicated region
    $region18: #{tpu_custom_call.1} parent=1 // pred_check
      _
    $region19: #{tpu_custom_call.1} parent=1 // pred_check_branch
      %34 = sbr.rel (0) target = $region21
    $region20: #{tpu_custom_call.1} parent=1 // pred_region
      %36 = vsyncadd [#allocation6], 0
      %s38 = sshll.u32 %s4, 4
      %s39 = int_to_ptr.hbm [resolvable:$true] %s38
      %s40 = sshll.u32 [#allocation5], 4
      %s41 = int_to_ptr.vmem [resolvable:$true] %s40
      %43 = dma.hbm_to_vmem [thread:$0]  %s39, 64, %s41, [#allocation6]
    $region21: #{tpu_custom_call.1} parent=1 // pred_fallthru
      _
    // Predicated region
    $region22: #{tpu_custom_call.1} parent=1 // pred_check
      _
    $region23: #{tpu_custom_call.1} parent=1 // pred_check_branch
      %45 = sbr.rel (0) target = $region25
    $region24: #{tpu_custom_call.1} parent=1 // pred_region
      %47 = vsyncadd [#allocation6], 0
      %s49 = sshll.u32 %s5, 4
      %s50 = int_to_ptr.hbm [resolvable:$true] %s49
      %s51 = sshll.u32 [#allocation7], 4
      %s52 = int_to_ptr.vmem [resolvable:$true] %s51
      %54 = dma.hbm_to_vmem [thread:$0]  %s50, 128, %s52, [#allocation6]
    $region25: #{tpu_custom_call.1} parent=1 // pred_fallthru
      _
    // Predicated region
    $region26: #{tpu_custom_call.1} parent=1 // pred_check
      _
    $region27: #{tpu_custom_call.1} parent=1 // pred_check_branch
      %56 = sbr.rel (0) target = $region29
    $region28: #{tpu_custom_call.1} parent=1 // pred_region
      %58 = dma.done [#allocation3], 1024
    $region29: #{tpu_custom_call.1} parent=1 // pred_fallthru
      _
    // Predicated region
    $region30: #{tpu_custom_call.1} parent=1 // pred_check
      _
    $region31: #{tpu_custom_call.1} parent=1 // pred_check_branch
      %60 = sbr.rel (0) target = $region33
    $region32: #{tpu_custom_call.1} parent=1 // pred_region
      %62 = dma.done [#allocation6], 64
    $region33: #{tpu_custom_call.1} parent=1 // pred_fallthru
      _
    // Predicated region
    $region34: #{tpu_custom_call.1} parent=1 // pred_check
      _
    $region35: #{tpu_custom_call.1} parent=1 // pred_check_branch
      %64 = sbr.rel (0) target = $region37
    $region36: #{tpu_custom_call.1} parent=1 // pred_region
      %66 = dma.done [#allocation6], 128
    $region37: #{tpu_custom_call.1} parent=1 // pred_fallthru
      _
    %v68 = vld [vmem:[%s0] sm:$0xf]
    %v69 = vld [vmem:[%s0 + $0x4] sm:$0xf]
    %v70 = vld [vmem:[%s0 + $0x8] sm:$0xf]
    %v71 = vld [vmem:[%s0 + $0xc] sm:$0xf]
    %v72 = vld [vmem:[%s0 + $0x10] sm:$0xf]
    %v73 = vld [vmem:[%s0 + $0x14] sm:$0xf]
    %v74 = vld [vmem:[%s0 + $0x18] sm:$0xf]
    %v75 = vld [vmem:[%s0 + $0x1c] sm:$0xf]
    %v76 = vld [vmem:[%s0 + $0x20] sm:$0xf]
    %v77 = vld [vmem:[%s0 + $0x24] sm:$0xf]
    %v78 = vld [vmem:[%s0 + $0x28] sm:$0xf]
    %v79 = vld [vmem:[%s0 + $0x2c] sm:$0xf]
    %v80 = vld [vmem:[%s0 + $0x30] sm:$0xf]
    %v81 = vld [vmem:[%s0 + $0x34] sm:$0xf]
    %v82 = vld [vmem:[%s0 + $0x38] sm:$0xf]
    %v83 = vld [vmem:[%s0 + $0x3c] sm:$0xf]
    %v84 = vld [vmem:[#allocation7] sm:$0x1]
    %v85 = vld [vmem:[#allocation7 + $0x1] sm:$0x1]
    %v86 = vld [vmem:[#allocation7 + $0x2] sm:$0x1]
    %v87 = vld [vmem:[#allocation7 + $0x3] sm:$0x1]
    %v88 = vld [vmem:[%s1] sm:$0xf]
    %v89 = vld [vmem:[%s1 + $0x4] sm:$0xf]
    %v90 = vld [vmem:[%s1 + $0x8] sm:$0xf]
    %v91 = vld [vmem:[%s1 + $0xc] sm:$0xf]
    %v92 = vperm.slane %v84, 0
    %v109 = vunpack.c.l.b16 %v68
    %v110 = vunpack.c.l.b16 %v69
    %v111 = vunpack.c.l.b16 %v70
    %v112 = vunpack.c.l.b16 %v71
    %v113 = vunpack.c.l.b16 %v72
    %v114 = vunpack.c.l.b16 %v73
    %v115 = vunpack.c.l.b16 %v74
    %v116 = vunpack.c.l.b16 %v75
    %v117 = vunpack.c.l.b16 %v76
    %v118 = vunpack.c.l.b16 %v77
    %v119 = vunpack.c.l.b16 %v78
    %v120 = vunpack.c.l.b16 %v79
    %v121 = vunpack.c.l.b16 %v80
    %v122 = vunpack.c.l.b16 %v81
    %v123 = vunpack.c.l.b16 %v82
    %v124 = vunpack.c.l.b16 %v83
    %v125 = vpack.c.b16 %v110, %v109
    %v126 = vpack.c.b16 %v112, %v111
    %v127 = vpack.c.b16 %v114, %v113
    %v128 = vpack.c.b16 %v116, %v115
    %v129 = vpack.c.b16 %v118, %v117
    %v130 = vpack.c.b16 %v120, %v119
    %v131 = vpack.c.b16 %v122, %v121
    %v132 = vpack.c.b16 %v124, %v123
    %v137 = vunpack.c.l.b16 %v88
    %v138 = vunpack.c.l.b16 %v89
    %v139 = vunpack.c.l.b16 %v90
    %v140 = vunpack.c.l.b16 %v91
    %v141 = vpack.c.b16 %v138, %v137
    %v142 = vpack.c.b16 %v140, %v139
    %vm145 = vcmask 261120
    %v147 = vsel %vm145, %v125, 0
    %v150 = vsel %vm145, %v126, 0
    %v153 = vsel %vm145, %v127, 0
    %v156 = vsel %vm145, %v128, 0
    %v159 = vsel %vm145, %v129, 0
    %v162 = vsel %vm145, %v130, 0
    %v165 = vsel %vm145, %v131, 0
    %v168 = vsel %vm145, %v132, 0
    %170 = vmatpush.bf16.msra.mxu0 0
    %171 = vmatpush.bf16.msra.mxu0 0
    %172 = vmatpush.bf16.msra.mxu0 0
    %173 = vmatpush.bf16.msra.mxu0 0
    %174 = vmatpush.bf16.msra.mxu0 0
    %175 = vmatpush.bf16.msra.mxu0 0
    %176 = vmatpush.bf16.msra.mxu0 %v142
    %177 = vmatpush.bf16.msra.mxu0 %v141
    %178 = vmatmul.bf16.gmra.mxu0 %v147
    %v179 = vpop.f32.mrf.mxu0
    %v180 = vadd.f32 %v92, %v179
    %v181 = vpop.f32.mrf.mxu0
    %v182 = vadd.f32 %v92, %v181
    %183 = vmatmul.bf16.gmra.mxu0 %v150
    %v184 = vpop.f32.mrf.mxu0
    %v185 = vadd.f32 %v92, %v184
    %v186 = vpop.f32.mrf.mxu0
    %v187 = vadd.f32 %v92, %v186
    %188 = vmatmul.bf16.gmra.mxu0 %v153
    %v189 = vpop.f32.mrf.mxu0
    %v190 = vadd.f32 %v92, %v189
    %v191 = vpop.f32.mrf.mxu0
    %v192 = vadd.f32 %v92, %v191
    %193 = vmatmul.bf16.gmra.mxu0 %v156
    %v194 = vpop.f32.mrf.mxu0
    %v195 = vadd.f32 %v92, %v194
    %v196 = vpop.f32.mrf.mxu0
    %v197 = vadd.f32 %v92, %v196
    %198 = vmatmul.bf16.gmra.mxu0 %v159
    %v199 = vpop.f32.mrf.mxu0
    %v200 = vadd.f32 %v92, %v199
    %v201 = vpop.f32.mrf.mxu0
    %v202 = vadd.f32 %v92, %v201
    %203 = vmatmul.bf16.gmra.mxu0 %v162
    %v204 = vpop.f32.mrf.mxu0
    %v205 = vadd.f32 %v92, %v204
    %v206 = vpop.f32.mrf.mxu0
    %v207 = vadd.f32 %v92, %v206
    %208 = vmatmul.bf16.gmra.mxu0 %v165
    %v209 = vpop.f32.mrf.mxu0
    %v210 = vadd.f32 %v92, %v209
    %v211 = vpop.f32.mrf.mxu0
    %v212 = vadd.f32 %v92, %v211
    %213 = vmatmul.bf16.gmra.mxu0 %v168
    %v214 = vpop.f32.mrf.mxu0
    %v215 = vadd.f32 %v92, %v214
    %v216 = vpop.f32.mrf.mxu0
    %v217 = vadd.f32 %v92, %v216
    %218 = vdwg.mxu0
    %v219 = vmax.f32 %v180, 0.0
    %v220 = vmax.f32 %v182, 0.0
    %v221 = vmax.f32 %v185, 0.0
    %v222 = vmax.f32 %v187, 0.0
    %v223 = vmax.f32 %v190, 0.0
    %v224 = vmax.f32 %v192, 0.0
    %v225 = vmax.f32 %v195, 0.0
    %v226 = vmax.f32 %v197, 0.0
    %v227 = vmax.f32 %v200, 0.0
    %v228 = vmax.f32 %v202, 0.0
    %v229 = vmax.f32 %v205, 0.0
    %v230 = vmax.f32 %v207, 0.0
    %v231 = vmax.f32 %v210, 0.0
    %v232 = vmax.f32 %v212, 0.0
    %v233 = vmax.f32 %v215, 0.0
    %v234 = vmax.f32 %v217, 0.0
    %v235 = vpack.c.bf16 %v220, %v219
    %v236 = vpack.c.bf16 %v222, %v221
    %v237 = vpack.c.bf16 %v224, %v223
    %v238 = vpack.c.bf16 %v226, %v225
    %v239 = vpack.c.bf16 %v228, %v227
    %v240 = vpack.c.bf16 %v230, %v229
    %v241 = vpack.c.bf16 %v232, %v231
    %v242 = vpack.c.bf16 %v234, %v233
    %v243 = vld [vmem:[%s2] sm:$0xf]
    %v244 = vld [vmem:[%s2 + $0x4] sm:$0xf]
    %v245 = vld [vmem:[%s2 + $0x8] sm:$0xf]
    %v246 = vld [vmem:[%s2 + $0xc] sm:$0xf]
    %v247 = vld [vmem:[%s2 + $0x10] sm:$0xf]
    %v248 = vld [vmem:[%s2 + $0x14] sm:$0xf]
    %v249 = vld [vmem:[%s2 + $0x18] sm:$0xf]
    %v250 = vld [vmem:[%s2 + $0x1c] sm:$0xf]
    %v251 = vld [vmem:[%s2 + $0x20] sm:$0xf]
    %v252 = vld [vmem:[%s2 + $0x24] sm:$0xf]
    %v253 = vld [vmem:[%s2 + $0x28] sm:$0xf]
    %v254 = vld [vmem:[%s2 + $0x2c] sm:$0xf]
    %v255 = vld [vmem:[%s2 + $0x30] sm:$0xf]
    %v256 = vld [vmem:[%s2 + $0x34] sm:$0xf]
    %v257 = vld [vmem:[%s2 + $0x38] sm:$0xf]
    %v258 = vld [vmem:[%s2 + $0x3c] sm:$0xf]
    %v259 = vperm.slane %v85, 0
    %v276 = vunpack.c.l.b16 %v243
    %v277 = vunpack.c.l.b16 %v244
    %v278 = vunpack.c.l.b16 %v245
    %v279 = vunpack.c.l.b16 %v246
    %v280 = vunpack.c.l.b16 %v247
    %v281 = vunpack.c.l.b16 %v248
    %v282 = vunpack.c.l.b16 %v249
    %v283 = vunpack.c.l.b16 %v250
    %v284 = vunpack.c.l.b16 %v251
    %v285 = vunpack.c.l.b16 %v252
    %v286 = vunpack.c.l.b16 %v253
    %v287 = vunpack.c.l.b16 %v254
    %v288 = vunpack.c.l.b16 %v255
    %v289 = vunpack.c.l.b16 %v256
    %v290 = vunpack.c.l.b16 %v257
    %v291 = vunpack.c.l.b16 %v258
    %v292 = vpack.c.b16 %v277, %v276
    %v293 = vpack.c.b16 %v279, %v278
    %v294 = vpack.c.b16 %v281, %v280
    %v295 = vpack.c.b16 %v283, %v282
    %v296 = vpack.c.b16 %v285, %v284
    %v297 = vpack.c.b16 %v287, %v286
    %v298 = vpack.c.b16 %v289, %v288
    %v299 = vpack.c.b16 %v291, %v290
    %308 = vmatpush.bf16.msra.mxu0 %v299
    %309 = vmatpush.bf16.msra.mxu0 %v298
    %310 = vmatpush.bf16.msra.mxu0 %v297
    %311 = vmatpush.bf16.msra.mxu0 %v296
    %312 = vmatpush.bf16.msra.mxu0 %v295
    %313 = vmatpush.bf16.msra.mxu0 %v294
    %314 = vmatpush.bf16.msra.mxu0 %v293
    %315 = vmatpush.bf16.msra.mxu0 %v292
    %316 = vmatmul.bf16.gmra.mxu0 %v235
    %v317 = vpop.f32.mrf.mxu0
    %v318 = vadd.f32 %v259, %v317
    %v319 = vpop.f32.mrf.mxu0
    %v320 = vadd.f32 %v259, %v319
    %321 = vmatmul.bf16.gmra.mxu0 %v236
    %v322 = vpop.f32.mrf.mxu0
    %v323 = vadd.f32 %v259, %v322
    %v324 = vpop.f32.mrf.mxu0
    %v325 = vadd.f32 %v259, %v324
    %326 = vmatmul.bf16.gmra.mxu0 %v237
    %v327 = vpop.f32.mrf.mxu0
    %v328 = vadd.f32 %v259, %v327
    %v329 = vpop.f32.mrf.mxu0
    %v330 = vadd.f32 %v259, %v329
    %331 = vmatmul.bf16.gmra.mxu0 %v238
    %v332 = vpop.f32.mrf.mxu0
    %v333 = vadd.f32 %v259, %v332
    %v334 = vpop.f32.mrf.mxu0
    %v335 = vadd.f32 %v259, %v334
    %336 = vmatmul.bf16.gmra.mxu0 %v239
    %v337 = vpop.f32.mrf.mxu0
    %v338 = vadd.f32 %v259, %v337
    %v339 = vpop.f32.mrf.mxu0
    %v340 = vadd.f32 %v259, %v339
    %341 = vmatmul.bf16.gmra.mxu0 %v240
    %v342 = vpop.f32.mrf.mxu0
    %v343 = vadd.f32 %v259, %v342
    %v344 = vpop.f32.mrf.mxu0
    %v345 = vadd.f32 %v259, %v344
    %346 = vmatmul.bf16.gmra.mxu0 %v241
    %v347 = vpop.f32.mrf.mxu0
    %v348 = vadd.f32 %v259, %v347
    %v349 = vpop.f32.mrf.mxu0
    %v350 = vadd.f32 %v259, %v349
    %351 = vmatmul.bf16.gmra.mxu0 %v242
    %v352 = vpop.f32.mrf.mxu0
    %v353 = vadd.f32 %v259, %v352
    %v354 = vpop.f32.mrf.mxu0
    %v355 = vadd.f32 %v259, %v354
    %356 = vdwg.mxu0
    %v357 = vmax.f32 %v318, 0.0
    %v358 = vmax.f32 %v320, 0.0
    %v359 = vmax.f32 %v323, 0.0
    %v360 = vmax.f32 %v325, 0.0
    %v361 = vmax.f32 %v328, 0.0
    %v362 = vmax.f32 %v330, 0.0
    %v363 = vmax.f32 %v333, 0.0
    %v364 = vmax.f32 %v335, 0.0
    %v365 = vmax.f32 %v338, 0.0
    %v366 = vmax.f32 %v340, 0.0
    %v367 = vmax.f32 %v343, 0.0
    %v368 = vmax.f32 %v345, 0.0
    %v369 = vmax.f32 %v348, 0.0
    %v370 = vmax.f32 %v350, 0.0
    %v371 = vmax.f32 %v353, 0.0
    %v372 = vmax.f32 %v355, 0.0
    %v373 = vpack.c.bf16 %v358, %v357
    %v374 = vpack.c.bf16 %v360, %v359
    %v375 = vpack.c.bf16 %v362, %v361
    %v376 = vpack.c.bf16 %v364, %v363
    %v377 = vpack.c.bf16 %v366, %v365
    %v378 = vpack.c.bf16 %v368, %v367
    %v379 = vpack.c.bf16 %v370, %v369
    %v380 = vpack.c.bf16 %v372, %v371
    %v381 = vld [vmem:[#allocation2] sm:$0xf]
    %v382 = vld [vmem:[#allocation2 + $0x4] sm:$0xf]
    %v383 = vld [vmem:[#allocation2 + $0x8] sm:$0xf]
    %v384 = vld [vmem:[#allocation2 + $0xc] sm:$0xf]
    %v385 = vld [vmem:[#allocation2 + $0x10] sm:$0xf]
    %v386 = vld [vmem:[#allocation2 + $0x14] sm:$0xf]
    %v387 = vld [vmem:[#allocation2 + $0x18] sm:$0xf]
    %v388 = vld [vmem:[#allocation2 + $0x1c] sm:$0xf]
    %v389 = vld [vmem:[#allocation2 + $0x20] sm:$0xf]
    %v390 = vld [vmem:[#allocation2 + $0x24] sm:$0xf]
    %v391 = vld [vmem:[#allocation2 + $0x28] sm:$0xf]
    %v392 = vld [vmem:[#allocation2 + $0x2c] sm:$0xf]
    %v393 = vld [vmem:[#allocation2 + $0x30] sm:$0xf]
    %v394 = vld [vmem:[#allocation2 + $0x34] sm:$0xf]
    %v395 = vld [vmem:[#allocation2 + $0x38] sm:$0xf]
    %v396 = vld [vmem:[#allocation2 + $0x3c] sm:$0xf]
    %v397 = vperm.slane %v86, 0
    %v414 = vunpack.c.l.b16 %v381
    %v415 = vunpack.c.l.b16 %v382
    %v416 = vunpack.c.l.b16 %v383
    %v417 = vunpack.c.l.b16 %v384
    %v418 = vunpack.c.l.b16 %v385
    %v419 = vunpack.c.l.b16 %v386
    %v420 = vunpack.c.l.b16 %v387
    %v421 = vunpack.c.l.b16 %v388
    %v422 = vunpack.c.l.b16 %v389
    %v423 = vunpack.c.l.b16 %v390
    %v424 = vunpack.c.l.b16 %v391
    %v425 = vunpack.c.l.b16 %v392
    %v426 = vunpack.c.l.b16 %v393
    %v427 = vunpack.c.l.b16 %v394
    %v428 = vunpack.c.l.b16 %v395
    %v429 = vunpack.c.l.b16 %v396
    %v430 = vpack.c.b16 %v415, %v414
    %v431 = vpack.c.b16 %v417, %v416
    %v432 = vpack.c.b16 %v419, %v418
    %v433 = vpack.c.b16 %v421, %v420
    %v434 = vpack.c.b16 %v423, %v422
    %v435 = vpack.c.b16 %v425, %v424
    %v436 = vpack.c.b16 %v427, %v426
    %v437 = vpack.c.b16 %v429, %v428
    %446 = vmatpush.bf16.msra.mxu0 %v437
    %447 = vmatpush.bf16.msra.mxu0 %v436
    %448 = vmatpush.bf16.msra.mxu0 %v435
    %449 = vmatpush.bf16.msra.mxu0 %v434
    %450 = vmatpush.bf16.msra.mxu0 %v433
    %451 = vmatpush.bf16.msra.mxu0 %v432
    %452 = vmatpush.bf16.msra.mxu0 %v431
    %453 = vmatpush.bf16.msra.mxu0 %v430
    %454 = vmatmul.bf16.gmra.mxu0 %v373
    %v455 = vpop.f32.mrf.mxu0
    %v456 = vadd.f32 %v397, %v455
    %v457 = vpop.f32.mrf.mxu0
    %v458 = vadd.f32 %v397, %v457
    %459 = vmatmul.bf16.gmra.mxu0 %v374
    %v460 = vpop.f32.mrf.mxu0
    %v461 = vadd.f32 %v397, %v460
    %v462 = vpop.f32.mrf.mxu0
    %v463 = vadd.f32 %v397, %v462
    %464 = vmatmul.bf16.gmra.mxu0 %v375
    %v465 = vpop.f32.mrf.mxu0
    %v466 = vadd.f32 %v397, %v465
    %v467 = vpop.f32.mrf.mxu0
    %v468 = vadd.f32 %v397, %v467
    %469 = vmatmul.bf16.gmra.mxu0 %v376
    %v470 = vpop.f32.mrf.mxu0
    %v471 = vadd.f32 %v397, %v470
    %v472 = vpop.f32.mrf.mxu0
    %v473 = vadd.f32 %v397, %v472
    %474 = vmatmul.bf16.gmra.mxu0 %v377
    %v475 = vpop.f32.mrf.mxu0
    %v476 = vadd.f32 %v397, %v475
    %v477 = vpop.f32.mrf.mxu0
    %v478 = vadd.f32 %v397, %v477
    %479 = vmatmul.bf16.gmra.mxu0 %v378
    %v480 = vpop.f32.mrf.mxu0
    %v481 = vadd.f32 %v397, %v480
    %v482 = vpop.f32.mrf.mxu0
    %v483 = vadd.f32 %v397, %v482
    %484 = vmatmul.bf16.gmra.mxu0 %v379
    %v485 = vpop.f32.mrf.mxu0
    %v486 = vadd.f32 %v397, %v485
    %v487 = vpop.f32.mrf.mxu0
    %v488 = vadd.f32 %v397, %v487
    %489 = vmatmul.bf16.gmra.mxu0 %v380
    %v490 = vpop.f32.mrf.mxu0
    %v491 = vadd.f32 %v397, %v490
    %v492 = vpop.f32.mrf.mxu0
    %v493 = vadd.f32 %v397, %v492
    %494 = vdwg.mxu0
    %v495 = vmax.f32 %v456, 0.0
    %v496 = vmax.f32 %v458, 0.0
    %v497 = vmax.f32 %v461, 0.0
    %v498 = vmax.f32 %v463, 0.0
    %v499 = vmax.f32 %v466, 0.0
    %v500 = vmax.f32 %v468, 0.0
    %v501 = vmax.f32 %v471, 0.0
    %v502 = vmax.f32 %v473, 0.0
    %v503 = vmax.f32 %v476, 0.0
    %v504 = vmax.f32 %v478, 0.0
    %v505 = vmax.f32 %v481, 0.0
    %v506 = vmax.f32 %v483, 0.0
    %v507 = vmax.f32 %v486, 0.0
    %v508 = vmax.f32 %v488, 0.0
    %v509 = vmax.f32 %v491, 0.0
    %v510 = vmax.f32 %v493, 0.0
    %v511 = vld [vmem:[#allocation5] sm:$0xf]
    %v512 = vpack.c.bf16 %v496, %v495
    %v513 = vpack.c.bf16 %v498, %v497
    %v514 = vpack.c.bf16 %v500, %v499
    %v515 = vpack.c.bf16 %v502, %v501
    %v516 = vpack.c.bf16 %v504, %v503
    %v517 = vpack.c.bf16 %v506, %v505
    %v518 = vpack.c.bf16 %v508, %v507
    %v519 = vpack.c.bf16 %v510, %v509
    %s521 = vtos %v87
    %v522 = vstv %s521
    %524 = vmatpush.bf16.xpose.msra.mxu0 %v519
    %525 = vmatpush.bf16.xpose.msra.mxu0 %v518
    %526 = vmatpush.bf16.xpose.msra.mxu0 %v517
    %527 = vmatpush.bf16.xpose.msra.mxu0 %v516
    %528 = vmatpush.bf16.xpose.msra.mxu0 %v515
    %529 = vmatpush.bf16.xpose.msra.mxu0 %v514
    %530 = vmatpush.bf16.xpose.msra.mxu0 %v513
    %531 = vmatpush.bf16.xpose.msra.mxu0 %v512
    %532 = vmatmul.bf16.gmra.mxu0 %v511
    %v533 = vpop.f32.mrf.mxu0
    %v534 = vadd.f32 %v522, %v533
    %v535 = vpop.f32.mrf.mxu0
    %536 = vdwg.mxu0
    %537 = vst [vmem:[#allocation8] sm:$0xff] %v534
    // Predicated region
    $region38: #{tpu_custom_call.1} parent=1 // pred_check
      _
    $region39: #{tpu_custom_call.1} parent=1 // pred_check_branch
      %539 = sbr.rel (0) target = $region41
    $region40: #{tpu_custom_call.1} parent=1 // pred_region
      %541 = vsyncadd [#allocation4], 0
      %s543 = sshll.u32 [#allocation8], 4
      %s544 = int_to_ptr.vmem [resolvable:$true] %s543
      %s545 = sshll.u32 %s6, 4
      %s546 = int_to_ptr.hbm [resolvable:$true] %s545
      %548 = dma.vmem_to_hbm [thread:$0]  %s544, 128, %s546, [#allocation4]
    $region41: #{tpu_custom_call.1} parent=1 // pred_fallthru
      _
    // Predicated region
    $region42: #{tpu_custom_call.1} parent=1 // pred_check
      _
    $region43: #{tpu_custom_call.1} parent=1 // pred_check_branch
      %550 = sbr.rel (0) target = $region45
    $region44: #{tpu_custom_call.1} parent=1 // pred_region
      %552 = dma.done [#allocation4], 128
    $region45: #{tpu_custom_call.1} parent=1 // pred_fallthru
      _
    %553 = vsyncpa [#allocation3], 1
    %554 = vsyncpa [#allocation6], 1
    %555 = vsyncpa [#allocation4], 1

</llo_original>
